<compile_context>
chip_gen: v7x
topology: tpu7x:2x2x1
jax: 0.10.0
libtpu: 0.0.40
codegen_flags: <defaults>
</compile_context>

<pallas_src>
import functools

import jax
import jax.numpy as jnp
from jax.experimental import pallas as pl
from jax.experimental.pallas import tpu as pltpu


# ----------------------------------------------------------------------------
# In-kernel helpers
# ----------------------------------------------------------------------------

def _ppo_token_loss(lp_ref, olp_ref, adv_ref, *, clip_eps: float,
                    low_precision_diff: bool):
    """Per-token PPO clipped loss for one [TB, TL] tile (f32)."""
    if low_precision_diff:
        # bf16 sub (one packed [16,128] vreg op) + one cast; v6e/v7x only.
        diff = (lp_ref[...] - olp_ref[...]).astype(jnp.float32)
    else:
        diff = lp_ref[...].astype(jnp.float32) - olp_ref[...].astype(jnp.float32)
    ratio = jnp.exp(diff)                                   # EUP exp

    adv = adv_ref[...]                                      # [TB, 1] f32
    # -min(r*a, clip(r)*a) == -a * (a >= 0 ? min(r, 1+eps) : max(r, 1-eps))
    # (exact algebraic identity; saves two VALU ops per element vs the naive
    #  two-mul + clip + min formulation).
    picked = jnp.where(adv >= 0.0,
                       jnp.minimum(ratio, 1.0 + clip_eps),
                       jnp.maximum(ratio, 1.0 - clip_eps))  # [TB, TL]
    return picked * (-adv)                                  # [TB, TL]


def _accumulate(acc_ref, x):
    """acc_ref ([TB, lanes] f32) += lane-dense partial sum of x ([TB, TL])."""
    lanes = acc_ref.shape[-1]
    tl = x.shape[-1]
    if lanes > 1 and tl % lanes == 0:
        # Pure VALU adds over 128-lane column chunks; one scratch RMW per step.
        part = x[:, 0:lanes]
        for c in range(1, tl // lanes):
            part = part + x[:, c * lanes:(c + 1) * lanes]
        acc_ref[...] += part
    else:
        # Small / unaligned L tile: single keepdims reduce (XLU).
        acc_ref[...] += jnp.sum(x, axis=-1, keepdims=True)


# ----------------------------------------------------------------------------
# Kernels
# ----------------------------------------------------------------------------
# NOTE: the accumulator pattern below is only correct because the L
# (reduction) grid axis is the LAST axis, marked "arbitrary", and the
# out / adv index maps are constant in l.  Do not reorder the grid.

def _policy_loss_masked_kernel(lp_ref, olp_ref, adv_ref, mask_ref, out_ref,
                               num_acc, den_acc, *, clip_eps: float,
                               low_precision_diff: bool):
    l = pl.program_id(1)

    @pl.when(l == 0)
    def _init():
        num_acc[...] = jnp.zeros_like(num_acc)
        den_acc[...] = jnp.zeros_like(den_acc)

    loss = _ppo_token_loss(lp_ref, olp_ref, adv_ref, clip_eps=clip_eps,
                           low_precision_diff=low_precision_diff)
    maskf = mask_ref[...].astype(jnp.float32)               # int8/bool/float -> f32
    _accumulate(num_acc, loss * maskf)
    _accumulate(den_acc, maskf)

    @pl.when(l == pl.num_programs(1) - 1)
    def _finalize():
        num = jnp.sum(num_acc[...], axis=-1, keepdims=True)
        den = jnp.sum(den_acc[...], axis=-1, keepdims=True)
        out_ref[...] = num / (den + 1e-8)                    # masked_mean(dim=1)


def _policy_loss_unmasked_kernel(lp_ref, olp_ref, adv_ref, out_ref, sum_acc,
                                 *, clip_eps: float, inv_l: float,
                                 low_precision_diff: bool):
    l = pl.program_id(1)

    @pl.when(l == 0)
    def _init():
        sum_acc[...] = jnp.zeros_like(sum_acc)

    loss = _ppo_token_loss(lp_ref, olp_ref, adv_ref, clip_eps=clip_eps,
                           low_precision_diff=low_precision_diff)
    _accumulate(sum_acc, loss)

    @pl.when(l == pl.num_programs(1) - 1)
    def _finalize():
        # Per-row mean over L.  mean over B outside the kernel equals the
        # reference loss.mean() because every row has the same length L.
        out_ref[...] = jnp.sum(sum_acc[...], axis=-1, keepdims=True) * inv_l


# ----------------------------------------------------------------------------
# Wrapper
# ----------------------------------------------------------------------------

# tb candidates start at 32 so 1-byte masks respect the (32,128) int8 sublane
# packing without a full-B fallback; bf16 (16) and f32 (8) are also satisfied.
_TB_CANDIDATES = (512, 256, 128, 64, 32)
_TL_CANDIDATES = (4096, 2048, 1024, 512, 256, 128)


def _vmem_capacity_bytes() -> int:
    try:
        return int(pltpu.get_tpu_info().vmem_capacity_bytes)
    except Exception:
        return 64 * 1024 * 1024      # conservative (v7x per-TC)


def _supports_cheap_bf16_valu() -> bool:
    """bf16 VALU is worthwhile on v6e / v7x only (v5e decomposes it)."""
    try:
        kind = jax.devices()[0].device_kind.lower()
    except Exception:
        return False
    return ("v6" in kind) or ("v7" in kind)


def _pick_tiles(B: int, L: int, stream_bytes_per_elem: int,
                streamed_budget: int):
    tb_cands = [c for c in _TB_CANDIDATES if B % c == 0]
    # Prefer >= 2 B-blocks so both v7x TensorCores get work (no-op on v5e/v6e).
    multi = [c for c in tb_cands if B // c >= 2]
    tb_cands = (multi or tb_cands) or [B]
    tl_cands = [c for c in _TL_CANDIDATES if L % c == 0] or [L]
    for tb in tb_cands:
        for tl in tl_cands:
            if 2 * tb * tl * stream_bytes_per_elem <= streamed_budget:
                return tb, tl
    return tb_cands[-1], tl_cands[-1]


def policy_loss(log_probs: jax.Array,
                old_log_probs: jax.Array,
                advantages: jax.Array,
                action_mask=None,
                clip_eps: float = 0.2,
                *,
                block_b: int | None = None,
                block_l: int | None = None,
                low_precision_diff: bool | None = None) -> jax.Array:
    """JAX wrapper matching PolicyLoss.forward. Returns a scalar f32 loss."""
    B, L = log_probs.shape
    lp = log_probs                 # stream native dtype (bf16 etc.), cast in-kernel
    olp = old_log_probs
    adv = jnp.reshape(advantages, (B, 1)).astype(jnp.float32)   # tiny

    use_mask = action_mask is not None
    if use_mask:
        mask = action_mask
        if jnp.issubdtype(mask.dtype, jnp.bool_):
            # 1 byte -> 1 byte; keeps mask HBM traffic at 1 B/elem.
            mask = mask.astype(jnp.int8)
        # float / int masks are streamed natively and cast to f32 in-kernel.

    if low_precision_diff is None:
        low_precision_diff = (lp.dtype == jnp.bfloat16
                              and olp.dtype == jnp.bfloat16
                              and _supports_cheap_bf16_valu())

    stream_bytes = lp.dtype.itemsize + olp.dtype.itemsize
    if use_mask:
        stream_bytes += mask.dtype.itemsize

    vmem_cap = _vmem_capacity_bytes()
    cap_limit = max(vmem_cap - 16 * 1024 * 1024, 16 * 1024 * 1024)
    streamed_budget = int(0.35 * vmem_cap)

    if block_b is None or block_l is None:
        auto_tb, auto_tl = _pick_tiles(B, L, stream_bytes, streamed_budget)
        tb = block_b if block_b is not None else auto_tb
        tl = block_l if block_l is not None else auto_tl
    else:
        tb, tl = block_b, block_l
    assert B % tb == 0 and L % tl == 0, (B, L, tb, tl)
    grid = (B // tb, L // tl)

    acc_lanes = 128 if tl % 128 == 0 else 1
    n_scratch = 2 if use_mask else 1

    streamed = 2 * tb * tl * stream_bytes            # double-buffered inputs
    vmem_need = (streamed
                 + 2 * tb * 4 * 2                    # adv + out blocks (x2 bufs)
                 + n_scratch * tb * acc_lanes * 4    # accumulators
                 + (2 << 20))                        # slack
    if vmem_need > cap_limit:
        raise ValueError(
            f"tile ({tb},{tl}) needs ~{vmem_need >> 20} MiB VMEM; budget is "
            f"{cap_limit >> 20} MiB on this chip — pick smaller block_b/block_l")
    vmem_limit = int(min(max(2 * vmem_need, 16 * 1024 * 1024), cap_limit))

    cparams = pltpu.CompilerParams(
        dimension_semantics=("parallel", "arbitrary"),
        vmem_limit_bytes=vmem_limit)

    lp_spec = pl.BlockSpec((tb, tl), lambda i, l: (i, l))
    olp_spec = pl.BlockSpec((tb, tl), lambda i, l: (i, l))
    mask_spec = pl.BlockSpec((tb, tl), lambda i, l: (i, l))
    adv_spec = pl.BlockSpec((tb, 1), lambda i, l: (i, 0))
    out_spec = pl.BlockSpec((tb, 1), lambda i, l: (i, 0))
    out_shape = jax.ShapeDtypeStruct((B, 1), jnp.float32)

    if use_mask:
        kernel = functools.partial(_policy_loss_masked_kernel,
                                   clip_eps=float(clip_eps),
                                   low_precision_diff=bool(low_precision_diff))
        per_row = pl.pallas_call(
            kernel,
            out_shape=out_shape,
            grid=grid,
            in_specs=[lp_spec, olp_spec, adv_spec, mask_spec],
            out_specs=out_spec,
            scratch_shapes=[pltpu.VMEM((tb, acc_lanes), jnp.float32),
                            pltpu.VMEM((tb, acc_lanes), jnp.float32)],
            compiler_params=cparams,
        )(lp, olp, adv, mask)
    else:
        kernel = functools.partial(_policy_loss_unmasked_kernel,
                                   clip_eps=float(clip_eps),
                                   inv_l=1.0 / float(L),
                                   low_precision_diff=bool(low_precision_diff))
        per_row = pl.pallas_call(
            kernel,
            out_shape=out_shape,
            grid=grid,
            in_specs=[lp_spec, olp_spec, adv_spec],
            out_specs=out_spec,
            scratch_shapes=[pltpu.VMEM((tb, acc_lanes), jnp.float32)],
            compiler_params=cparams,
        )(lp, olp, adv)

    # Final mean over B: tiny [B] reduction outside the kernel (keeps the
    # B-blocks disjoint => parallel, and per-row partial sums stay f32).
    return jnp.mean(per_row)


# ----------------------------------------------------------------------------
# Reference + tests
# ----------------------------------------------------------------------------

def _reference_policy_loss(log_probs, old_log_probs, advantages,
                           action_mask=None, clip_eps: float = 0.2):
    """Pure-JAX reference mirroring the PyTorch code (f32 compute)."""
    adv = jnp.reshape(advantages, (advantages.shape[0], 1)).astype(jnp.float32)
    lp = log_probs.astype(jnp.float32)
    olp = old_log_probs.astype(jnp.float32)
    ratio = jnp.exp(lp - olp)
    surr1 = ratio * adv
    surr2 = jnp.clip(ratio, 1 - clip_eps, 1 + clip_eps) * adv
    loss = -jnp.minimum(surr1, surr2)
    if action_mask is not None:
        m = action_mask.astype(jnp.float32)
        loss = (loss * m).sum(-1) / (m.sum(-1) + 1e-8)
    return loss.mean()


if __name__ == "__main__":
    key = jax.random.PRNGKey(0)
    ks = jax.random.split(key, 8)

    # --- primary small test: B=2, L=8, f32, f32 mask (single-block path) ---
    B, L = 2, 8
    log_probs = -jax.nn.softplus(jax.random.normal(ks[0], (B, L), jnp.float32))
    old_log_probs = -jax.nn.softplus(jax.random.normal(ks[1], (B, L), jnp.float32))
    advantages = jax.random.normal(ks[2], (B,), jnp.float32)
    action_mask = (jax.random.uniform(ks[3], (B, L)) > 0.3).astype(jnp.float32)

    out_masked = jax.block_until_ready(
        policy_loss(log_probs, old_log_probs, advantages, action_mask))
    ref_masked = _reference_policy_loss(log_probs, old_log_probs, advantages,
                                        action_mask)
    assert jnp.allclose(out_masked, ref_masked, atol=1e-5, rtol=1e-5), (
        out_masked, ref_masked)

    out_plain = jax.block_until_ready(
        policy_loss(log_probs, old_log_probs, advantages, None))
    ref_plain = _reference_policy_loss(log_probs, old_log_probs, advantages, None)
    assert jnp.allclose(out_plain, ref_plain, atol=1e-5, rtol=1e-5), (
        out_plain, ref_plain)

    # --- tiled test (L-accumulation + lane-dense acc + int8 mask streaming) ---
    B2, L2 = 64, 512
    lp2 = (-jax.nn.softplus(jax.random.normal(ks[4], (B2, L2)))).astype(jnp.bfloat16)
    olp2 = (-jax.nn.softplus(jax.random.normal(ks[5], (B2, L2)))).astype(jnp.bfloat16)
    adv2 = jax.random.normal(ks[6], (B2,), jnp.float32)
    mask2 = jax.random.uniform(ks[7], (B2, L2)) > 0.3          # bool mask

    ref2 = _reference_policy_loss(lp2, olp2, adv2, mask2)
    ref3 = _reference_policy_loss(lp2, olp2, adv2, None)

    # f32 compute path (low_precision_diff=False): tight tolerance.
    out2 = jax.block_until_ready(
        policy_loss(lp2, olp2, adv2, mask2, block_b=32, block_l=256,
                    low_precision_diff=False))
    assert jnp.allclose(out2, ref2, atol=1e-4, rtol=1e-4), (out2, ref2)

    out3 = jax.block_until_ready(
        policy_loss(lp2, olp2, adv2, None, low_precision_diff=False))
    assert jnp.allclose(out3, ref3, atol=1e-4, rtol=1e-4), (out3, ref3)

    # Auto path (tiles + bf16-diff auto-selected per chip): loose tolerance
    # covers the bf16 subtract-before-cast rounding on v6e/v7x.
    out4 = jax.block_until_ready(policy_loss(lp2, olp2, adv2, mask2))
    assert jnp.allclose(out4, ref2, atol=3e-2, rtol=3e-2), (out4, ref2)

    print("KERNEL_OK")
</pallas_src>

<mosaic_0001>
module attributes {stable_mosaic.version = 11 : i64} {
  func.func @_policy_loss_masked_kernel(%arg0: i32, %arg1: i32, %arg2: memref<2x8xf32, #tpu.memory_space<vmem>>, %arg3: memref<2x8xf32, #tpu.memory_space<vmem>>, %arg4: memref<2x1xf32, #tpu.memory_space<vmem>>, %arg5: memref<2x8xf32, #tpu.memory_space<vmem>>, %arg6: memref<2x1xf32, #tpu.memory_space<vmem>>, %arg7: memref<2x1xf32, #tpu.memory_space<vmem>>, %arg8: memref<2x1xf32, #tpu.memory_space<vmem>>) attributes {dimension_semantics = [#tpu.dimension_semantics<parallel>, #tpu.dimension_semantics<arbitrary>], iteration_bounds = array<i64: 1, 1>, scalar_prefetch = 0 : i64, scratch_operands = 2 : i64, tpu.core_type = #tpu.core_type<tc>, window_params = [{transform_indices = @transform_0, window_bounds = array<i64: 2, 8>}, {transform_indices = @transform_1, window_bounds = array<i64: 2, 8>}, {transform_indices = @transform_2, window_bounds = array<i64: 2, 1>}, {transform_indices = @transform_3, window_bounds = array<i64: 2, 8>}, {transform_indices = @transform_4, window_bounds = array<i64: 2, 1>}]} {
    %c0_i32 = arith.constant 0 : i32
    %0 = arith.cmpi eq, %arg1, %c0_i32 : i32
    %1 = arith.extui %0 : i1 to i32
    %c0_i32_0 = arith.constant 0 : i32
    %2 = arith.cmpi ne, %1, %c0_i32_0 : i32
    scf.if %2 {
      %cst_23 = arith.constant 0.000000e+00 : f32
      %36 = vector.broadcast %cst_23 : f32 to vector<2x1xf32>
      %c0_24 = arith.constant 0 : index
      %c0_25 = arith.constant 0 : index
      %37 = vector.load %arg7[%c0_24, %c0_25] : memref<2x1xf32, #tpu.memory_space<vmem>>, vector<2x1xf32>
      tpu.vector_store %arg7[%c0_24, %c0_25], %36 {strides = array<i32>} : memref<2x1xf32, #tpu.memory_space<vmem>>, vector<2x1xf32>,
      %cst_26 = arith.constant 0.000000e+00 : f32
      %38 = vector.broadcast %cst_26 : f32 to vector<2x1xf32>
      %c0_27 = arith.constant 0 : index
      %c0_28 = arith.constant 0 : index
      %39 = vector.load %arg8[%c0_27, %c0_28] : memref<2x1xf32, #tpu.memory_space<vmem>>, vector<2x1xf32>
      tpu.vector_store %arg8[%c0_27, %c0_28], %38 {strides = array<i32>} : memref<2x1xf32, #tpu.memory_space<vmem>>, vector<2x1xf32>,
    } else {
    }
    %c0 = arith.constant 0 : index
    %c0_1 = arith.constant 0 : index
    %3 = vector.load %arg2[%c0, %c0_1] : memref<2x8xf32, #tpu.memory_space<vmem>>, vector<2x8xf32>
    %c0_2 = arith.constant 0 : index
    %c0_3 = arith.constant 0 : index
    %4 = vector.load %arg3[%c0_2, %c0_3] : memref<2x8xf32, #tpu.memory_space<vmem>>, vector<2x8xf32>
    %5 = arith.subf %3, %4 : vector<2x8xf32>
    %6 = math.exp %5 : vector<2x8xf32>
    %c0_4 = arith.constant 0 : index
    %c0_5 = arith.constant 0 : index
    %7 = vector.load %arg4[%c0_4, %c0_5] : memref<2x1xf32, #tpu.memory_space<vmem>>, vector<2x1xf32>
    %cst = arith.constant 0.000000e+00 : f32
    %8 = vector.broadcast %cst : f32 to vector<2x1xf32>
    %9 = arith.cmpf oge, %7, %8 : vector<2x1xf32>
    %cst_6 = arith.constant 1.200000e+00 : f32
    %10 = vector.broadcast %cst_6 : f32 to vector<2x8xf32>
    %11 = arith.minimumf %6, %10 : vector<2x8xf32>
    %cst_7 = arith.constant 8.000000e-01 : f32
    %12 = vector.broadcast %cst_7 : f32 to vector<2x8xf32>
    %13 = arith.maximumf %6, %12 : vector<2x8xf32>
    %14 = vector.shape_cast %9 : vector<2x1xi1> to vector<2x1xi1>
    %15 = vector.broadcast %14 : vector<2x1xi1> to vector<2x8xi1>
    %16 = arith.select %15, %11, %13 : vector<2x8xi1>, vector<2x8xf32>
    %cst_8 = arith.constant 0.000000e+00 : f32
    %17 = vector.broadcast %cst_8 : f32 to vector<2x1xf32>
    %18 = arith.subf %17, %7 : vector<2x1xf32>
    %19 = vector.broadcast %18 : vector<2x1xf32> to vector<2x8xf32>
    %20 = arith.mulf %16, %19 : vector<2x8xf32>
    %c0_9 = arith.constant 0 : index
    %c0_10 = arith.constant 0 : index
    %21 = vector.load %arg5[%c0_9, %c0_10] : memref<2x8xf32, #tpu.memory_space<vmem>>, vector<2x8xf32>
    %22 = arith.mulf %20, %21 : vector<2x8xf32>
    %c0_11 = arith.constant 0 : index
    %c0_12 = arith.constant 0 : index
    %23 = vector.load %arg7[%c0_11, %c0_12] : memref<2x1xf32, #tpu.memory_space<vmem>>, vector<2x1xf32>
    %cst_13 = arith.constant dense<0.000000e+00> : vector<2xf32>
    %24 = vector.multi_reduction <add>, %22, %cst_13 [1] : vector<2x8xf32> to vector<2xf32>
    %25 = vector.shape_cast %24 : vector<2xf32> to vector<2x1xf32>
    %26 = arith.addf %23, %25 : vector<2x1xf32>
    %c0_14 = arith.constant 0 : index
    %c0_15 = arith.constant 0 : index
    %27 = vector.load %arg7[%c0_14, %c0_15] : memref<2x1xf32, #tpu.memory_space<vmem>>, vector<2x1xf32>
    tpu.vector_store %arg7[%c0_14, %c0_15], %26 {strides = array<i32>} : memref<2x1xf32, #tpu.memory_space<vmem>>, vector<2x1xf32>,
    %c0_16 = arith.constant 0 : index
    %c0_17 = arith.constant 0 : index
    %28 = vector.load %arg8[%c0_16, %c0_17] : memref<2x1xf32, #tpu.memory_space<vmem>>, vector<2x1xf32>
    %cst_18 = arith.constant dense<0.000000e+00> : vector<2xf32>
    %29 = vector.multi_reduction <add>, %21, %cst_18 [1] : vector<2x8xf32> to vector<2xf32>
    %30 = vector.shape_cast %29 : vector<2xf32> to vector<2x1xf32>
    %31 = arith.addf %28, %30 : vector<2x1xf32>
    %c0_19 = arith.constant 0 : index
    %c0_20 = arith.constant 0 : index
    %32 = vector.load %arg8[%c0_19, %c0_20] : memref<2x1xf32, #tpu.memory_space<vmem>>, vector<2x1xf32>
    tpu.vector_store %arg8[%c0_19, %c0_20], %31 {strides = array<i32>} : memref<2x1xf32, #tpu.memory_space<vmem>>, vector<2x1xf32>,
    %c0_i32_21 = arith.constant 0 : i32
    %33 = arith.cmpi eq, %arg1, %c0_i32_21 : i32
    %34 = arith.extui %33 : i1 to i32
    %c0_i32_22 = arith.constant 0 : i32
    %35 = arith.cmpi ne, %34, %c0_i32_22 : i32
    scf.if %35 {
      %c0_23 = arith.constant 0 : index
      %c0_24 = arith.constant 0 : index
      %36 = vector.load %arg7[%c0_23, %c0_24] : memref<2x1xf32, #tpu.memory_space<vmem>>, vector<2x1xf32>
      %cst_25 = arith.constant dense<0.000000e+00> : vector<2xf32>
      %37 = vector.multi_reduction <add>, %36, %cst_25 [1] : vector<2x1xf32> to vector<2xf32>
      %38 = vector.shape_cast %37 : vector<2xf32> to vector<2x1xf32>
      %c0_26 = arith.constant 0 : index
      %c0_27 = arith.constant 0 : index
      %39 = vector.load %arg8[%c0_26, %c0_27] : memref<2x1xf32, #tpu.memory_space<vmem>>, vector<2x1xf32>
      %cst_28 = arith.constant dense<0.000000e+00> : vector<2xf32>
      %40 = vector.multi_reduction <add>, %39, %cst_28 [1] : vector<2x1xf32> to vector<2xf32>
      %41 = vector.shape_cast %40 : vector<2xf32> to vector<2x1xf32>
      %cst_29 = arith.constant 9.99999993E-9 : f32
      %42 = vector.broadcast %cst_29 : f32 to vector<2x1xf32>
      %43 = arith.addf %41, %42 : vector<2x1xf32>
      %44 = arith.divf %38, %43 : vector<2x1xf32>
      %c0_30 = arith.constant 0 : index
      %c0_31 = arith.constant 0 : index
      %45 = vector.load %arg6[%c0_30, %c0_31] : memref<2x1xf32, #tpu.memory_space<vmem>>, vector<2x1xf32>
      tpu.vector_store %arg6[%c0_30, %c0_31], %44 {strides = array<i32>} : memref<2x1xf32, #tpu.memory_space<vmem>>, vector<2x1xf32>,
    } else {
    }
    return
  }
  func.func @transform_0(%arg0: i32, %arg1: i32) -> (i32, i32) {
    %c0_i32 = arith.constant 0 : i32
    return %arg0, %arg1 : i32, i32
  }
  func.func @transform_1(%arg0: i32, %arg1: i32) -> (i32, i32) {
    %c0_i32 = arith.constant 0 : i32
    return %arg0, %arg1 : i32, i32
  }
  func.func @transform_2(%arg0: i32, %arg1: i32) -> (i32, i32) {
    %c0_i32 = arith.constant 0 : i32
    %c0_i32_0 = arith.constant 0 : i32
    return %arg0, %c0_i32 : i32, i32
  }
  func.func @transform_3(%arg0: i32, %arg1: i32) -> (i32, i32) {
    %c0_i32 = arith.constant 0 : i32
    return %arg0, %arg1 : i32, i32
  }
  func.func @transform_4(%arg0: i32, %arg1: i32) -> (i32, i32) {
    %c0_i32 = arith.constant 0 : i32
    %c0_i32_0 = arith.constant 0 : i32
    return %arg0, %c0_i32 : i32, i32
  }
}

</mosaic_0001>

<llo_original>
// kernel: tpu_custom_call.1
$region0: #{tpu_custom_call.1}
  #allocation0 [shape = 'u32[]', space=smem, size = 0x4, offset = 0x4, fixed_abs, tag = 'smem constant byte address 0x4 - core index']
  #allocation1 [shape = 'u32[144,128]{1,0:T(1,128)}', space=vmem, size = 0x12000, scoped, tag = 'internal scratch']
  #allocation2 [shape = 'f32[2,1]{1,0:T(2,128)}', space=vmem, size = 0x400, scoped, tag = 'scratch operand']
  #allocation3 [shape = 'f32[2,1]{1,0:T(2,128)}', space=vmem, size = 0x400, scoped, tag = 'scratch operand']
  %s0 = inlined_call_operand.vmem [shape: f32[2,8], index: 0, kind: input, shape index: {}]
  %s1 = inlined_call_operand.vmem [shape: f32[2,8], index: 1, kind: input, shape index: {}]
  %s2 = inlined_call_operand.vmem [shape: f32[2,1], index: 2, kind: input, shape index: {}]
  %s3 = inlined_call_operand.vmem [shape: f32[2,8], index: 3, kind: input, shape index: {}]
  %s4 = inlined_call_operand.vmem [shape: f32[2,1], index: 4, kind: output, shape index: {}]
  %s5 = sld [smem:[#allocation0]]
  $region34: #{tpu_custom_call.1} parent=0
    _
  %s7 = ssub.s32 1, %s5
  %s8 = scalar_select 0, %s7, %s5
  // Predicated region
  $region2: #{tpu_custom_call.1} parent=0 // pred_check
    _
  $region3: #{tpu_custom_call.1} parent=0 // pred_check_branch
    %10 = sbr.rel (0) target = $region5
  $region4: #{tpu_custom_call.1} parent=0 // pred_region
    _
  $region5: #{tpu_custom_call.1} parent=0 // pred_fallthru
    _
  // Predicated region
  $region6: #{tpu_custom_call.1} parent=0 // pred_check
    _
  $region7: #{tpu_custom_call.1} parent=0 // pred_check_branch
    %12 = sbr.rel (0) target = $region9
  $region8: #{tpu_custom_call.1} parent=0 // pred_region
    _
  $region9: #{tpu_custom_call.1} parent=0 // pred_fallthru
    _
  // Predicated region
  $region10: #{tpu_custom_call.1} parent=0 // pred_check
    _
  $region11: #{tpu_custom_call.1} parent=0 // pred_check_branch
    %14 = sbr.rel (0) target = $region13
  $region12: #{tpu_custom_call.1} parent=0 // pred_region
    _
  $region13: #{tpu_custom_call.1} parent=0 // pred_fallthru
    _
  // Predicated region
  $region14: #{tpu_custom_call.1} parent=0 // pred_check
    _
  $region15: #{tpu_custom_call.1} parent=0 // pred_check_branch
    %16 = sbr.rel (0) target = $region17
  $region16: #{tpu_custom_call.1} parent=0 // pred_region
    _
  $region17: #{tpu_custom_call.1} parent=0 // pred_fallthru
    _
  %p17 = scmp.eq.s32.totalorder 0, 0
  // Predicated region
  $region18: #{tpu_custom_call.1} parent=0 // pred_check
    %p18 = pneg %p17
  $region19: #{tpu_custom_call.1} parent=0 // pred_check_branch
    %20 = sbr.rel (%p18) target = $region21
  $region20: #{tpu_custom_call.1} parent=0 // pred_region
    %vm21 = vcmask 1024
    %22 = vst.msk [vmem:[#allocation2] sm:$0x3] %vm21, 0.0
    %23 = vst.msk [vmem:[#allocation3] sm:$0x3] %vm21, 0.0
  $region21: #{tpu_custom_call.1} parent=0 // pred_fallthru
    _
  %v24 = vld [vmem:[%s0] sm:$0x3]
  %v25 = vld [vmem:[%s1] sm:$0x3]
  %v26 = vsub.f32 %v24, %v25
  %v27 = vmul.f32 %v26, 1.442695
  %v28 = vpow.pop %v27
  %v29 = vld [vmem:[%s2] sm:$0x3]
  %vm30 = vcmp.ge.f32.partialorder %v29, 0.0
  %v31 = vmin.f32 %v28, 1.2
  %v32 = vmax.f32 %v28, 0.8
  %v33 = vsel %vm30, 1, 0
  %34 = vset.pattern.permute.xlu0 0
  %35 = vperm.xlu0 %34, %v33
  %v36 = vpop.permute.xlu0 %35
  %vm37 = vcmp.eq.s32.totalorder %v36, 1
  %v38 = vsel %vm37, %v31, %v32
  %v39 = vsub.f32 0.0, %v29
  %41 = vset.pattern.permute.xlu0 0
  %42 = vperm.xlu0 %41, %v39
  %v43 = vpop.permute.xlu0 %42
  %v45 = vmul.f32 %v38, %v43
  %v46 = vld [vmem:[%s3] sm:$0x3]
  %v47 = vmul.f32 %v45, %v46
  %v48 = vld [vmem:[#allocation2] sm:$0x3]
  %vm49 = vcmask 58368
  %v50 = vsel %vm49, %v47, 0.0
  %51 = vadd.xlane.f32.xlu0 %v50
  %v52 = vpop.xlane.xlu0 %51
  %v53 = vadd.f32 %v48, %v52
  %vm54 = vcmask 1024
  %55 = vst.msk [vmem:[#allocation2] sm:$0x3] %vm54, %v53
  %v56 = vld [vmem:[#allocation3] sm:$0x3]
  %v57 = vsel %vm49, %v46, 0.0
  %58 = vadd.xlane.f32.xlu0 %v57
  %v59 = vpop.xlane.xlu0 %58
  %v60 = vadd.f32 %v56, %v59
  %61 = vst.msk [vmem:[#allocation3] sm:$0x3] %vm54, %v60
  // Predicated region
  $region22: #{tpu_custom_call.1} parent=0 // pred_check
    %p62 = pneg %p17
  $region23: #{tpu_custom_call.1} parent=0 // pred_check_branch
    %64 = sbr.rel (%p62) target = $region25
  $region24: #{tpu_custom_call.1} parent=0 // pred_region
    %v65 = vld [vmem:[#allocation2] sm:$0x3]
    %v66 = vadd.f32 %v65, 0.0
    %v67 = vld [vmem:[#allocation3] sm:$0x3]
    %v68 = vadd.f32 %v67, 0.0
    %v69 = vadd.f32 %v68, 1e-08
    %v70 = vrcp.pop %v69
    %v71 = vmul.f32 %v66, %v70
    %72 = vst.msk [vmem:[%s4] sm:$0x3] %vm54, %v71
  $region25: #{tpu_custom_call.1} parent=0 // pred_fallthru
    _
  // Predicated region
  $region26: #{tpu_custom_call.1} parent=0 // pred_check
    _
  $region27: #{tpu_custom_call.1} parent=0 // pred_check_branch
    %74 = sbr.rel (0) target = $region29
  $region28: #{tpu_custom_call.1} parent=0 // pred_region
    _
  $region29: #{tpu_custom_call.1} parent=0 // pred_fallthru
    _
  // Predicated region
  $region30: #{tpu_custom_call.1} parent=0 // pred_check
    _
  $region31: #{tpu_custom_call.1} parent=0 // pred_check_branch
    %76 = sbr.rel (0) target = $region33
  $region32: #{tpu_custom_call.1} parent=0 // pred_region
    _
  $region33: #{tpu_custom_call.1} parent=0 // pred_fallthru
    _

</llo_original>
